<compile_context>
chip_gen: v7x
topology: tpu7x:2x2x1
jax: 0.10.0
libtpu: 0.0.40
codegen_flags: <defaults>
</compile_context>

<pallas_src>
import functools

import jax
import jax.numpy as jnp
from jax import lax
from jax.experimental import pallas as pl
from jax.experimental.pallas import tpu as pltpu

_MIB = 1024 * 1024


def _round_up(x, m):
    return -(-x // m) * m


def _vmem_capacity_bytes():
    """Per-core VMEM capacity; conservative (v7x, 64 MiB) fallback."""
    try:
        cap = getattr(pltpu.get_tpu_info(), "vmem_capacity_bytes", None)
        if cap:
            return int(cap)
    except Exception:
        pass
    return 64 * _MIB


def _onehot_matmul_kernel(idx_ref, table_ref, out_ref):
    # idx_ref:   (bn, 1) int32 block of flattened token ids
    # table_ref: (V, E)  full embedding table, VMEM-resident, single-buffered
    # out_ref:   (bn, E) gathered embeddings for this token block
    ids = idx_ref[...]                                          # (bn, 1)
    v = table_ref.shape[0]
    vocab_iota = lax.broadcasted_iota(jnp.int32, (1, v), 1)     # hoisted-in-kernel iota
    onehot = (vocab_iota == ids).astype(table_ref.dtype)        # (bn, V), exact 0/1
    out_ref[...] = jnp.dot(
        onehot, table_ref[...], preferred_element_type=jnp.float32
    ).astype(out_ref.dtype)


def _row_gather_kernel(ids_ref, row_ref, out_ref):
    # ids_ref: (N_pad,) int32 scalar-prefetch ids (consumed by the index_maps)
    # row_ref: (1, E)   table row DMA'd in for grid step (i, j)
    # out_ref: (bn, E)  output block, VMEM-resident across the inner row axis
    del ids_ref
    j = pl.program_id(1)
    out_ref[pl.ds(j, 1), :] = row_ref[...]


@functools.partial(jax.jit, static_argnames=("block_n", "use_gather"))
def event_embedding(events, table, block_n=512, use_gather=None):
    """events: (B, S) integer ids; table: (V, E) embedding weights (f32/bf16).

    Returns (B, S, E) embeddings (dropout p=0.0 -> identity).
    """
    B, S = events.shape
    V, E = table.shape
    N = B * S
    itemsize = jnp.dtype(table.dtype).itemsize
    cap = _vmem_capacity_bytes()

    idx_flat = events.reshape(-1).astype(jnp.int32)

    # Token-axis tiling: default 512 (better HBM-roofline than 256), never
    # bigger than the (8-aligned) problem, clamped so the (bn, V) one-hot
    # temporary stays under ~4 MiB.
    bn = min(block_n, _round_up(N, 8))
    bn_onehot_cap = max(8, ((4 * _MIB) // max(V * itemsize, 1)) // 8 * 8)
    bn_matmul = _round_up(min(bn, bn_onehot_cap), 8)

    # Per-core VMEM budget of the matmul path (table single-buffered).
    matmul_need = (
        V * E * itemsize                 # resident table (Buffered(1))
        + 2 * bn_matmul * E * itemsize   # double-buffered output blocks
        + 2 * bn_matmul * 4              # double-buffered id blocks
        + bn_matmul * V * itemsize       # one-hot temporary
        + bn_matmul * E * 4              # f32 MXU result before cast
    )
    if use_gather is None:
        # Switch to the DMA row gather once the resident-table design would
        # consume more than ~half of per-core VMEM (hit 2x earlier on v7x).
        use_gather = matmul_need + 8 * _MIB > cap // 2

    if not use_gather:
        bn = bn_matmul
        num_blocks = -(-N // bn)
        n_pad = num_blocks * bn
        idx = idx_flat
        if n_pad != N:
            idx = jnp.pad(idx, (0, n_pad - N))   # pad id 0 == padding_idx
        idx = idx.reshape(n_pad, 1)

        vmem_limit = min(
            max(int(matmul_need * 1.5) + 8 * _MIB, 32 * _MIB),
            int(cap * 0.7),
        )

        cost = pl.CostEstimate(
            flops=2 * n_pad * V * E,
            transcendentals=0,
            bytes_accessed=int(
                n_pad * 4                    # ids
                + V * E * itemsize           # table, DMA'd once (single buffer)
                + n_pad * E * itemsize       # output
            ),
        )

        out = pl.pallas_call(
            _onehot_matmul_kernel,
            out_shape=jax.ShapeDtypeStruct((n_pad, E), table.dtype),
            grid_spec=pltpu.PrefetchScalarGridSpec(
                num_scalar_prefetch=0,
                grid=(num_blocks,),
                in_specs=[
                    pl.BlockSpec((bn, 1), lambda i: (i, 0)),     # id column block
                    pl.BlockSpec((V, E), lambda i: (0, 0),       # resident table
                                 pipeline_mode=pl.Buffered(1)),  # single-buffered
                ],
                out_specs=pl.BlockSpec((bn, E), lambda i: (i, 0)),
            ),
            compiler_params=pltpu.CompilerParams(
                dimension_semantics=("parallel",),   # token blocks shard across TCs
                vmem_limit_bytes=int(vmem_limit),
            ),
            cost_estimate=cost,
        )(idx, table)
    else:
        # Scalar-prefetch DMA row gather: no resident table, no MXU.
        bn_g = _round_up(min(bn, 256), 8)
        num_blocks = -(-N // bn_g)
        n_pad = num_blocks * bn_g
        ids = idx_flat
        if n_pad != N:
            ids = jnp.pad(ids, (0, n_pad - N))   # pad id 0 == padding_idx

        def _row_index_map(i, j, ids_ref):
            return (ids_ref[i * bn_g + j], 0)    # element offset along vocab axis

        cost = pl.CostEstimate(
            flops=0,
            transcendentals=0,
            bytes_accessed=int(n_pad * 4 + 2 * n_pad * E * itemsize),
        )

        out = pl.pallas_call(
            _row_gather_kernel,
            out_shape=jax.ShapeDtypeStruct((n_pad, E), table.dtype),
            grid_spec=pltpu.PrefetchScalarGridSpec(
                num_scalar_prefetch=1,
                grid=(num_blocks, bn_g),
                in_specs=[
                    pl.BlockSpec((pl.Element(1), E), _row_index_map),
                ],
                out_specs=pl.BlockSpec((bn_g, E), lambda i, j, ids_ref: (i, 0)),
            ),
            compiler_params=pltpu.CompilerParams(
                dimension_semantics=("parallel", "arbitrary"),
            ),
            cost_estimate=cost,
        )(ids, table)

    out = out if n_pad == N else out[:N]
    return out.reshape(B, S, E)


if __name__ == "__main__":
    # Small, deterministic setup consistent with the module.
    vocab_size = 128
    embedding_size = 32
    B, S = 2, 8

    key = jax.random.PRNGKey(0)
    k_table, k_events = jax.random.split(key)

    # nn.Embedding init ~ N(0,1); padding_idx=0 row is zeroed.
    table = jax.random.normal(k_table, (vocab_size, embedding_size), jnp.float32)
    table = table.at[0].set(0.0)

    events = jax.random.randint(k_events, (B, S), 0, vocab_size, dtype=jnp.int32)
    events = events.at[0, 0].set(0)   # exercise padding_idx=0

    ref = table[events]

    # 1) default path: one-hot matmul, single-buffered resident table.
    out = jax.block_until_ready(event_embedding(events, table))
    assert out.shape == (B, S, embedding_size)
    assert jnp.allclose(out, ref, atol=1e-5), "matmul-path mismatch vs gather"
    assert jnp.allclose(out[0, 0], 0.0), "padding_idx row not zero"

    # 2) tail handling: N = 3*5 = 15 is not a multiple of 8.
    events2 = jax.random.randint(key, (3, 5), 0, vocab_size, dtype=jnp.int32)
    out2 = jax.block_until_ready(event_embedding(events2, table))
    assert out2.shape == (3, 5, embedding_size)
    assert jnp.allclose(out2, table[events2], atol=1e-5), "tail-block mismatch"

    # 3) large-table fallback: force the scalar-prefetch DMA row-gather path.
    out3 = jax.block_until_ready(event_embedding(events, table, use_gather=True))
    assert jnp.allclose(out3, ref, atol=1e-5), "gather-path mismatch"
    assert jnp.allclose(out3[0, 0], 0.0), "gather-path padding row not zero"

    # 4) bf16 table opt-in (half table traffic, full-rate MXU); exact pass-through.
    table_bf16 = table.astype(jnp.bfloat16)
    out4 = jax.block_until_ready(event_embedding(events, table_bf16))
    assert out4.dtype == jnp.bfloat16
    assert jnp.allclose(
        out4.astype(jnp.float32), table_bf16[events].astype(jnp.float32)
    ), "bf16-table mismatch"

    print("KERNEL_OK")
</pallas_src>

<mosaic_0001>
module attributes {stable_mosaic.version = 11 : i64} {
  func.func @_onehot_matmul_kernel(%arg0: i32, %arg1: memref<16x1xi32, #tpu.memory_space<vmem>>, %arg2: memref<128x32xf32, #tpu.memory_space<vmem>>, %arg3: memref<16x32xf32, #tpu.memory_space<vmem>>) attributes {dimension_semantics = [#tpu.dimension_semantics<parallel>], iteration_bounds = array<i64: 1>, scalar_prefetch = 0 : i64, scratch_operands = 0 : i64, tpu.core_type = #tpu.core_type<tc>, window_params = [{transform_indices = @transform_0, window_bounds = array<i64: 16, 1>}, {pipeline_mode = #tpu.pipeline_mode<synchronous>, transform_indices = @transform_1, window_bounds = array<i64: 128, 32>}, {transform_indices = @transform_2, window_bounds = array<i64: 16, 32>}]} {
    %c0 = arith.constant 0 : index
    %c0_0 = arith.constant 0 : index
    %0 = vector.load %arg1[%c0, %c0_0] : memref<16x1xi32, #tpu.memory_space<vmem>>, vector<16x1xi32>
    %1 = tpu.iota {dimensions = array<i32: 1>} : vector<1x128xi32>
    %2 = vector.broadcast %1 : vector<1x128xi32> to vector<16x128xi32>
    %3 = vector.broadcast %0 : vector<16x1xi32> to vector<16x128xi32>
    %4 = arith.cmpi eq, %2, %3 : vector<16x128xi32>
    %5 = arith.extui %4 : vector<16x128xi1> to vector<16x128xi32>
    %6 = arith.sitofp %5 : vector<16x128xi32> to vector<16x128xf32>
    %c0_1 = arith.constant 0 : index
    %c0_2 = arith.constant 0 : index
    %7 = vector.load %arg2[%c0_1, %c0_2] : memref<128x32xf32, #tpu.memory_space<vmem>>, vector<128x32xf32>
    %cst = arith.constant dense<0.000000e+00> : vector<16x32xf32>
    %8 = tpu.matmul %6, %7, %cst {dimension_numbers = #tpu.dot_dimension_numbers<[1], [0], [0], [1], [0, 0, 1, 1], [], []>} : vector<16x128xf32>, vector<128x32xf32>, vector<16x32xf32> -> vector<16x32xf32>
    %c0_3 = arith.constant 0 : index
    %c0_4 = arith.constant 0 : index
    %9 = vector.load %arg3[%c0_3, %c0_4] : memref<16x32xf32, #tpu.memory_space<vmem>>, vector<16x32xf32>
    tpu.vector_store %arg3[%c0_3, %c0_4], %8 {strides = array<i32>} : memref<16x32xf32, #tpu.memory_space<vmem>>, vector<16x32xf32>,
    return
  }
  func.func @transform_0(%arg0: i32) -> (i32, i32) {
    %c0_i32 = arith.constant 0 : i32
    %c0_i32_0 = arith.constant 0 : i32
    return %arg0, %c0_i32 : i32, i32
  }
  func.func @transform_1(%arg0: i32) -> (i32, i32) {
    %c0_i32 = arith.constant 0 : i32
    %c0_i32_0 = arith.constant 0 : i32
    %c0_i32_1 = arith.constant 0 : i32
    return %c0_i32, %c0_i32_0 : i32, i32
  }
  func.func @transform_2(%arg0: i32) -> (i32, i32) {
    %c0_i32 = arith.constant 0 : i32
    %c0_i32_0 = arith.constant 0 : i32
    return %arg0, %c0_i32 : i32, i32
  }
}

</mosaic_0001>

<llo_original>
// kernel: event_embedding.1
$region0: #{event_embedding.1}
  #allocation0 [shape = 'u32[]', space=smem, size = 0x4, offset = 0x4, fixed_abs, tag = 'smem constant byte address 0x4 - core index']
  #allocation1 [shape = 'u32[144,128]{1,0:T(1,128)}', space=vmem, size = 0x12000, scoped, tag = 'internal scratch']
  %s0 = inlined_call_operand.vmem [shape: s32[16,1], index: 0, kind: input, shape index: {}]
  %s1 = inlined_call_operand.vmem [shape: f32[128,32], index: 1, kind: input, shape index: {}]
  %s2 = inlined_call_operand.hbm [shape: f32[16,32], index: 2, kind: output, shape index: {}]
  %s3 = sld [smem:[#allocation0]]
  $region18: #{event_embedding.1} parent=0
    _
  %s5 = ssub.s32 1, %s3
  %s6 = scalar_select 0, %s5, %s3
  $region1: #{event_embedding.1} parent=0
    #allocation2 [shape = 'u8[8192]{0}', space=vmem, size = 0x2000, scoped, tag = 'output window, operand 0, single buffered']
    #allocation3 [shape = 's32[1]{0}', space=sflag, size = 0x4, scoped, tag = 'scoped memory for event_embedding.1']
    %7 = vsyncpa [#allocation3], 0
    // Predicated region
    $region2: #{event_embedding.1} parent=1 // pred_check
      _
    $region3: #{event_embedding.1} parent=1 // pred_check_branch
      %9 = sbr.rel (0) target = $region5
    $region4: #{event_embedding.1} parent=1 // pred_region
      _
    $region5: #{event_embedding.1} parent=1 // pred_fallthru
      _
    // Predicated region
    $region6: #{event_embedding.1} parent=1 // pred_check
      _
    $region7: #{event_embedding.1} parent=1 // pred_check_branch
      %11 = sbr.rel (0) target = $region9
    $region8: #{event_embedding.1} parent=1 // pred_region
      _
    $region9: #{event_embedding.1} parent=1 // pred_fallthru
      _
    %v12 = vld [vmem:[%s0] sm:$0xff]
    %v13 = vld [vmem:[%s0 + $0x8] sm:$0xff]
    %v14 = vlaneseq
    %v15 = vand.u32 %v14, 127
    %16 = vset.pattern.permute.xlu0 0
    %17 = vperm.xlu0 %16, %v12
    %v18 = vpop.permute.xlu0 %17
    %19 = vset.pattern.permute.xlu0 0
    %20 = vperm.xlu0 %19, %v13
    %v21 = vpop.permute.xlu0 %20
    %vm22 = vcmp.eq.s32.totalorder %v15, %v18
    %vm23 = vcmp.eq.s32.totalorder %v15, %v21
    %v24 = vsel %vm22, 1, 0
    %v25 = vsel %vm23, 1, 0
    %v26 = vcvt.s32.f32 %v24
    %v27 = vcvt.s32.f32 %v25
    %v28 = vld [vmem:[%s1] sm:$0xff]
    %v29 = vld [vmem:[%s1 + $0x8] sm:$0xff]
    %v30 = vld [vmem:[%s1 + $0x10] sm:$0xff]
    %v31 = vld [vmem:[%s1 + $0x18] sm:$0xff]
    %v32 = vld [vmem:[%s1 + $0x20] sm:$0xff]
    %v33 = vld [vmem:[%s1 + $0x28] sm:$0xff]
    %v34 = vld [vmem:[%s1 + $0x30] sm:$0xff]
    %v35 = vld [vmem:[%s1 + $0x38] sm:$0xff]
    %v36 = vld [vmem:[%s1 + $0x40] sm:$0xff]
    %v37 = vld [vmem:[%s1 + $0x48] sm:$0xff]
    %v38 = vld [vmem:[%s1 + $0x50] sm:$0xff]
    %v39 = vld [vmem:[%s1 + $0x58] sm:$0xff]
    %v40 = vld [vmem:[%s1 + $0x60] sm:$0xff]
    %v41 = vld [vmem:[%s1 + $0x68] sm:$0xff]
    %v42 = vld [vmem:[%s1 + $0x70] sm:$0xff]
    %v43 = vld [vmem:[%s1 + $0x78] sm:$0xff]
    %44 = vmatprep.subr.mxu0 0.0
    %45 = vmatpush1.msra.mxu0 %v28
    %46 = vmatprep.subr.mxu0 0.0
    %47 = vmatpush1.msra.mxu0 %v29
    %48 = vmatprep.subr.mxu0 0.0
    %49 = vmatpush1.msra.mxu0 %v30
    %50 = vmatprep.subr.mxu0 0.0
    %51 = vmatpush1.msra.mxu0 %v31
    %52 = vmatprep.subr.mxu0 0.0
    %53 = vmatpush1.msra.mxu0 %v32
    %54 = vmatprep.subr.mxu0 0.0
    %55 = vmatpush1.msra.mxu0 %v33
    %56 = vmatprep.subr.mxu0 0.0
    %57 = vmatpush1.msra.mxu0 %v34
    %58 = vmatprep.subr.mxu0 0.0
    %59 = vmatpush1.msra.mxu0 %v35
    %60 = vmatprep.subr.mxu0 0.0
    %61 = vmatpush1.msra.mxu0 %v36
    %62 = vmatprep.subr.mxu0 0.0
    %63 = vmatpush1.msra.mxu0 %v37
    %64 = vmatprep.subr.mxu0 0.0
    %65 = vmatpush1.msra.mxu0 %v38
    %66 = vmatprep.subr.mxu0 0.0
    %67 = vmatpush1.msra.mxu0 %v39
    %68 = vmatprep.subr.mxu0 0.0
    %69 = vmatpush1.msra.mxu0 %v40
    %70 = vmatprep.subr.mxu0 0.0
    %71 = vmatpush1.msra.mxu0 %v41
    %72 = vmatprep.subr.mxu0 0.0
    %73 = vmatpush1.msra.mxu0 %v42
    %74 = vmatprep.subr.mxu0 0.0
    %75 = vmatpush1.msra.mxu0 %v43
    %76 = vmatprep.subr.mxu0 0.0
    %77 = vmatpush1.msra.mxu0 0.0
    %78 = vmatprep.subr.mxu0 0.0
    %79 = vmatpush1.msra.mxu0 0.0
    %80 = vmatprep.subr.mxu0 0.0
    %81 = vmatpush1.msra.mxu0 0.0
    %82 = vmatprep.subr.mxu0 0.0
    %83 = vmatpush1.msra.mxu0 0.0
    %84 = vmatprep.subr.mxu0 0.0
    %85 = vmatpush1.msra.mxu0 0.0
    %86 = vmatprep.subr.mxu0 0.0
    %87 = vmatpush1.msra.mxu0 0.0
    %88 = vmatprep.subr.mxu0 0.0
    %89 = vmatpush1.msra.mxu0 0.0
    %90 = vmatprep.subr.mxu0 0.0
    %91 = vmatpush1.msra.mxu0 0.0
    %92 = vmatprep.subr.mxu0 0.0
    %93 = vmatpush1.msra.mxu0 0.0
    %94 = vmatprep.subr.mxu0 0.0
    %95 = vmatpush1.msra.mxu0 0.0
    %96 = vmatprep.subr.mxu0 0.0
    %97 = vmatpush1.msra.mxu0 0.0
    %98 = vmatprep.subr.mxu0 0.0
    %99 = vmatpush1.msra.mxu0 0.0
    %100 = vmatprep.subr.mxu0 0.0
    %101 = vmatpush1.msra.mxu0 0.0
    %102 = vmatprep.subr.mxu0 0.0
    %103 = vmatpush1.msra.mxu0 0.0
    %104 = vmatprep.subr.mxu0 0.0
    %105 = vmatpush1.msra.mxu0 0.0
    %106 = vmatprep.subr.mxu0 0.0
    %107 = vmatpush1.msra.mxu0 0.0
    %108 = vmatprep.mubr.f32.mxu0 0.0
    %109 = vmatmul.mubr.f32.gmra.mrb[0].mxu0 %v26
    %v110 = vpop.f32.mrb[0].mxu0
    %v111 = vadd.f32 0.0, %v110
    %v112 = vpop.f32.mrb[0].mxu0
    %113 = vmatprep.mubr.f32.mxu0 0.0
    %114 = vmatmul.mubr.f32.gmra.mrb[0].mxu0 %v27
    %v115 = vpop.f32.mrb[0].mxu0
    %v116 = vadd.f32 0.0, %v115
    %v117 = vpop.f32.mrb[0].mxu0
    %118 = vdwg.mxu0
    %vm119 = vcmask 261120
    %120 = vst.msk [vmem:[#allocation2] sm:$0xff] %vm119, %v111
    %121 = vst.msk [vmem:[#allocation2 + $0x8] sm:$0xff] %vm119, %v116
    // Predicated region
    $region10: #{event_embedding.1} parent=1 // pred_check
      _
    $region11: #{event_embedding.1} parent=1 // pred_check_branch
      %123 = sbr.rel (0) target = $region13
    $region12: #{event_embedding.1} parent=1 // pred_region
      %s125 = ssub.s32 256, 256
      %126 = vsyncadd [#allocation3], %s125
      %s127 = sshll.u32 [#allocation2], 4
      %s128 = int_to_ptr.vmem [resolvable:$true] %s127
      %133 = dma.vmem_to_hbm [thread:$0]  %s128, 256, %s2, [#allocation3], 128, 128, 8
    $region13: #{event_embedding.1} parent=1 // pred_fallthru
      _
    // Predicated region
    $region14: #{event_embedding.1} parent=1 // pred_check
      _
    $region15: #{event_embedding.1} parent=1 // pred_check_branch
      %135 = sbr.rel (0) target = $region17
    $region16: #{event_embedding.1} parent=1 // pred_region
      %136 = dma.done [#allocation3], 256
    $region17: #{event_embedding.1} parent=1 // pred_fallthru
      _
    %137 = vsyncpa [#allocation3], 1

</llo_original>
